<compile_context>
chip_gen: v7x
topology: tpu7x:2x2x1
jax: 0.10.0
libtpu: 0.0.40
codegen_flags: <defaults>
</compile_context>

<pallas_src>
import numpy as np

import jax
import jax.numpy as jnp
from jax.experimental import pallas as pl
from jax.experimental.pallas import tpu as pltpu


# ---------------------------------------------------------------------------
# Kernels
# ---------------------------------------------------------------------------

def _fc1_kernel(x_ref, w1_ref, b1_ref, h_ref):
    """h = relu(x @ W1 + b1), output in bf16 (f32 accumulate)."""
    h = jnp.dot(x_ref[...], w1_ref[...],
                preferred_element_type=jnp.float32) + b1_ref[...]
    h_ref[...] = jnp.maximum(h, 0.0).astype(h_ref.dtype)


def _fc5_gumbel_kernel(h_ref, w5_ref, b5_ref, ge_ref, go_ref, out_ref):
    """One M-tile of fc5 + hard Gumbel argmax.

    w5_ref is the fused (256, 2*TILE_M) bf16 tile laid out as
    [channel-0 columns | channel-1 columns]; the two lane halves are the
    pair logits, so the gumbel_softmax(hard=True)[:, :, 0] forward value is
    a plain elementwise compare (ties -> channel 0, matching torch.argmax).
    """
    tile_m = out_ref.shape[-1]
    logits = jnp.dot(h_ref[...], w5_ref[...],
                     preferred_element_type=jnp.float32) + b5_ref[...]
    logits = jnp.maximum(logits, 0.0)            # relu(fc5(h))
    l0 = logits[:, :tile_m]                      # logits[:, :, 0]
    l1 = logits[:, tile_m:]                      # logits[:, :, 1]
    y0 = l0 + ge_ref[...]
    y1 = l1 + go_ref[...]
    out_ref[...] = jnp.where(y0 >= y1, 1.0, 0.0).astype(out_ref.dtype)


# ---------------------------------------------------------------------------
# Parameter packing (one-time, hoisted out of the forward hot path)
# ---------------------------------------------------------------------------

def _round_up(x, m):
    return pl.cdiv(x, m) * m


def prepare_params(params, n_nodes, max_tile_m=2048):
    """Pack raw (w1, b1, w5, b5) into the streaming layout used by the kernel.

    max_tile_m=2048 keeps the double-buffered bf16 weight tiles at ~4 MiB,
    well inside the scoped-VMEM limit on v5e/v6e/v7x; raise it on v6e if
    desired (128 MiB VMEM, bigger tiles amortize per-step overhead better).
    """
    w1, b1, w5, b5 = params
    M = n_nodes * (n_nodes - 1) // 2
    tile_m = int(min(_round_up(M, 128), max_tile_m))
    M_pad = int(_round_up(M, tile_m))
    n_tiles = M_pad // tile_m

    # Strided even/odd split + per-tile interleave, done ONCE here so the
    # forward path never re-gathers the (256, 2M) weight matrix.
    w5e = jnp.pad(w5[:, 0::2], ((0, 0), (0, M_pad - M)))     # channel 0
    w5o = jnp.pad(w5[:, 1::2], ((0, 0), (0, M_pad - M)))     # channel 1
    w5e = w5e.reshape(256, n_tiles, tile_m)
    w5o = w5o.reshape(256, n_tiles, tile_m)
    w5_packed = jnp.concatenate([w5e, w5o], axis=-1).reshape(256, 2 * M_pad)
    w5_packed = w5_packed.astype(jnp.bfloat16)               # halve HBM bytes

    b5e = jnp.pad(b5[0::2], (0, M_pad - M)).reshape(n_tiles, tile_m)
    b5o = jnp.pad(b5[1::2], (0, M_pad - M)).reshape(n_tiles, tile_m)
    b5_packed = jnp.concatenate([b5e, b5o], axis=-1).reshape(1, 2 * M_pad)

    # triu gather map: adj[b, i, j] = x_sel[b, pair_idx[i, j]] * mask[i, j].
    iu, ju = np.triu_indices(n_nodes, k=1)
    pair_idx = np.zeros((n_nodes, n_nodes), np.int32)
    pair_idx[iu, ju] = np.arange(M, dtype=np.int32)
    pair_idx = pair_idx + pair_idx.T                         # symmetric map
    mask = (~np.eye(n_nodes, dtype=bool)).astype(np.float32)  # zero diagonal

    return dict(
        w1=w1, b1=b1.reshape(1, -1),
        w5=w5_packed, b5=b5_packed,
        tile_m=tile_m, m=M, m_pad=M_pad, n_nodes=n_nodes,
        gather_idx=jnp.asarray(pair_idx), gather_mask=jnp.asarray(mask),
    )


# ---------------------------------------------------------------------------
# Forward
# ---------------------------------------------------------------------------

def decoder2_forward(x, prep, gumbel_noise, tau=1.0):
    """x: (B, latent_dim); returns symmetric binary adjacency (B, n, n)."""
    del tau  # argmax of (logits + g) / tau is invariant to tau > 0 (forward-only)

    B = x.shape[0]
    B_pad = int(_round_up(B, 8))                 # fill sublanes
    tile_m = prep["tile_m"]
    M, M_pad, n = prep["m"], prep["m_pad"], prep["n_nodes"]
    n_tiles = M_pad // tile_m

    x_p = jnp.pad(x, ((0, B_pad - B), (0, 0)))

    # --- fc1 + relu, computed once (hoisted out of the M-streaming kernel) ---
    h = pl.pallas_call(
        _fc1_kernel,
        out_shape=jax.ShapeDtypeStruct((B_pad, 256), jnp.bfloat16),
        in_specs=[pl.BlockSpec(memory_space=pltpu.MemorySpace.VMEM)] * 3,
        out_specs=pl.BlockSpec(memory_space=pltpu.MemorySpace.VMEM),
    )(x_p, prep["w1"], prep["b1"])

    ge = jnp.pad(gumbel_noise[..., 0], ((0, B_pad - B), (0, M_pad - M)))
    go = jnp.pad(gumbel_noise[..., 1], ((0, B_pad - B), (0, M_pad - M)))

    # --- fc5 + hard Gumbel, streamed over M tiles (double-buffered DMA) ---
    x_sel = pl.pallas_call(
        _fc5_gumbel_kernel,
        out_shape=jax.ShapeDtypeStruct((B_pad, M_pad), jnp.float32),
        grid_spec=pltpu.PrefetchScalarGridSpec(
            num_scalar_prefetch=0,
            grid=(n_tiles,),
            in_specs=[
                pl.BlockSpec((B_pad, 256), lambda i: (0, 0)),       # h (resident)
                pl.BlockSpec((256, 2 * tile_m), lambda i: (0, i)),  # fused W5 tile
                pl.BlockSpec((1, 2 * tile_m), lambda i: (0, i)),    # fused b5 tile
                pl.BlockSpec((B_pad, tile_m), lambda i: (0, i)),    # gumbel ch0
                pl.BlockSpec((B_pad, tile_m), lambda i: (0, i)),    # gumbel ch1
            ],
            out_specs=pl.BlockSpec((B_pad, tile_m), lambda i: (0, i)),
        ),
        compiler_params=pltpu.CompilerParams(
            dimension_semantics=("parallel",),   # v7x: shard tiles over 2 TCs
            vmem_limit_bytes=32 * 1024 * 1024,   # safe on v5e/v6e/v7x
        ),
    )(h, prep["w5"], prep["b5"], ge, go)

    x_sel = x_sel[:B, :M]

    # TODO(synk): triu scatter has no clean Pallas primitive; use a masked
    # gather in plain JAX (symmetric by construction, zero diagonal).
    adj = jnp.take(x_sel, prep["gather_idx"], axis=1) * prep["gather_mask"]
    return adj


# ---------------------------------------------------------------------------
# Init (PyTorch-Linear-style uniform init for the layers forward() uses)
# ---------------------------------------------------------------------------

def init_params(key, latent_dim, n_nodes):
    output_dim = 2 * n_nodes * (n_nodes - 1) // 2
    k1, k2, k3, k4 = jax.random.split(key, 4)
    bnd1 = 1.0 / jnp.sqrt(latent_dim)
    bnd5 = 1.0 / jnp.sqrt(256.0)
    w1 = jax.random.uniform(k1, (latent_dim, 256), jnp.float32, -bnd1, bnd1)
    b1 = jax.random.uniform(k2, (256,), jnp.float32, -bnd1, bnd1)
    w5 = jax.random.uniform(k3, (256, output_dim), jnp.float32, -bnd5, bnd5)
    b5 = jax.random.uniform(k4, (output_dim,), jnp.float32, -bnd5, bnd5)
    return (w1, b1, w5, b5)


if __name__ == "__main__":
    B, latent_dim, n_nodes = 2, 32, 8
    M = n_nodes * (n_nodes - 1) // 2

    key = jax.random.PRNGKey(0)
    kx, kp, kg = jax.random.split(key, 3)

    x = jax.random.normal(kx, (B, latent_dim), jnp.float32)
    params = init_params(kp, latent_dim, n_nodes)
    prep = prepare_params(params, n_nodes)
    gumbel_noise = jax.random.gumbel(kg, (B, M, 2), jnp.float32)

    adj = decoder2_forward(x, prep, gumbel_noise, tau=1.0)
    adj = jax.block_until_ready(adj)

    assert adj.shape == (B, n_nodes, n_nodes)
    # sanity: binary entries, symmetric, zero diagonal
    assert bool(jnp.all((adj == 0.0) | (adj == 1.0)))
    assert bool(jnp.allclose(adj, jnp.swapaxes(adj, 1, 2)))
    assert bool(jnp.all(jnp.diagonal(adj, axis1=1, axis2=2) == 0.0))
    print("KERNEL_OK")
</pallas_src>

<mosaic_0001>
module attributes {stable_mosaic.version = 11 : i64} {
  func.func @_fc1_kernel(%arg0: memref<8x32xf32, #tpu.memory_space<vmem>>, %arg1: memref<32x256xf32, #tpu.memory_space<vmem>>, %arg2: memref<1x256xf32, #tpu.memory_space<vmem>>, %arg3: memref<8x256xbf16, #tpu.memory_space<vmem>>) attributes {dimension_semantics = [], scalar_prefetch = 0 : i64, scratch_operands = 0 : i64, tpu.core_type = #tpu.core_type<tc>} {
    %c0 = arith.constant 0 : index
    %c0_0 = arith.constant 0 : index
    %0 = vector.load %arg0[%c0, %c0_0] : memref<8x32xf32, #tpu.memory_space<vmem>>, vector<8x32xf32>
    %c0_1 = arith.constant 0 : index
    %c0_2 = arith.constant 0 : index
    %1 = vector.load %arg1[%c0_1, %c0_2] : memref<32x256xf32, #tpu.memory_space<vmem>>, vector<32x256xf32>
    %cst = arith.constant dense<0.000000e+00> : vector<8x256xf32>
    %2 = tpu.matmul %0, %1, %cst {dimension_numbers = #tpu.dot_dimension_numbers<[1], [0], [0], [1], [0, 0, 1, 1], [], []>} : vector<8x32xf32>, vector<32x256xf32>, vector<8x256xf32> -> vector<8x256xf32>
    %c0_3 = arith.constant 0 : index
    %c0_4 = arith.constant 0 : index
    %3 = vector.load %arg2[%c0_3, %c0_4] : memref<1x256xf32, #tpu.memory_space<vmem>>, vector<1x256xf32>
    %4 = vector.broadcast %3 : vector<1x256xf32> to vector<8x256xf32>
    %5 = arith.addf %2, %4 : vector<8x256xf32>
    %cst_5 = arith.constant 0.000000e+00 : f32
    %6 = vector.broadcast %cst_5 : f32 to vector<8x256xf32>
    %7 = arith.maximumf %5, %6 : vector<8x256xf32>
    %8 = arith.truncf %7 : vector<8x256xf32> to vector<8x256xbf16>
    %c0_6 = arith.constant 0 : index
    %c0_7 = arith.constant 0 : index
    %9 = vector.load %arg3[%c0_6, %c0_7] : memref<8x256xbf16, #tpu.memory_space<vmem>>, vector<8x256xbf16>
    tpu.vector_store %arg3[%c0_6, %c0_7], %8 {strides = array<i32>} : memref<8x256xbf16, #tpu.memory_space<vmem>>, vector<8x256xbf16>,
    return
  }
}

</mosaic_0001>

<llo_original>
// kernel: tpu_custom_call.1
$region0: #{tpu_custom_call.1}
  #allocation0 [shape = 'u32[]', space=smem, size = 0x4, offset = 0x4, fixed_abs, tag = 'smem constant byte address 0x4 - core index']
  #allocation1 [shape = 'u32[144,128]{1,0:T(1,128)}', space=vmem, size = 0x12000, scoped, tag = 'internal scratch']
  %s0 = inlined_call_operand.hbm [shape: f32[8,32], index: 0, kind: input, shape index: {}]
  %s1 = inlined_call_operand.hbm [shape: f32[32,256], index: 1, kind: input, shape index: {}]
  %s2 = inlined_call_operand.vmem [shape: f32[1,256], index: 2, kind: input, shape index: {}]
  %s3 = inlined_call_operand.hbm [shape: bf16[8,256], index: 3, kind: output, shape index: {}]
  %s4 = sld [smem:[#allocation0]]
  $region30: #{tpu_custom_call.1} parent=0
    _
  %s6 = ssub.s32 1, %s4
  %s7 = scalar_select 0, %s6, %s4
  $region1: #{tpu_custom_call.1} parent=0
    #allocation2 [shape = 'u8[4096]{0}', space=vmem, size = 0x1000, scoped, tag = 'input window, operand 0, single buffered']
    #allocation3 [shape = 's32[1]{0}', space=sflag, size = 0x4, scoped, tag = 'scoped memory for tpu_custom_call.1']
    #allocation4 [shape = 's32[1]{0}', space=sflag, size = 0x4, scoped, tag = 'scoped memory for tpu_custom_call.1']
    #allocation5 [shape = 'u8[32768]{0}', space=vmem, size = 0x8000, scoped, tag = 'input window, operand 1, single buffered']
    #allocation6 [shape = 's32[1]{0}', space=sflag, size = 0x4, scoped, tag = 'scoped memory for tpu_custom_call.1']
    #allocation7 [shape = 'u8[4096]{0}', space=vmem, size = 0x1000, scoped, tag = 'output window, operand 0, single buffered']
    %8 = vsyncpa [#allocation3], 0
    %9 = vsyncpa [#allocation6], 0
    %10 = vsyncpa [#allocation4], 0
    // Predicated region
    $region2: #{tpu_custom_call.1} parent=1 // pred_check
      _
    $region3: #{tpu_custom_call.1} parent=1 // pred_check_branch
      %12 = sbr.rel (0) target = $region5
    $region4: #{tpu_custom_call.1} parent=1 // pred_region
      %s14 = ssub.s32 128, 128
      %15 = vsyncadd [#allocation3], %s14
      %s17 = sshll.u32 [#allocation2], 4
      %s18 = int_to_ptr.vmem [resolvable:$true] %s17
      %20 = dma.hbm_to_vmem [thread:$0]  %s0, 128, %s18, [#allocation3]
    $region5: #{tpu_custom_call.1} parent=1 // pred_fallthru
      _
    // Predicated region
    $region6: #{tpu_custom_call.1} parent=1 // pred_check
      _
    $region7: #{tpu_custom_call.1} parent=1 // pred_check_branch
      %22 = sbr.rel (0) target = $region9
    $region8: #{tpu_custom_call.1} parent=1 // pred_region
      %s24 = ssub.s32 1024, 1024
      %25 = vsyncadd [#allocation6], %s24
      %s26 = sshll.u32 [#allocation5], 4
      %s27 = int_to_ptr.vmem [resolvable:$true] %s26
      %32 = dma.hbm_to_vmem [thread:$0]  %s1, 1024, %s27, [#allocation6], 256, 256, 16
    $region9: #{tpu_custom_call.1} parent=1 // pred_fallthru
      _
    // Predicated region
    $region10: #{tpu_custom_call.1} parent=1 // pred_check
      _
    $region11: #{tpu_custom_call.1} parent=1 // pred_check_branch
      %34 = sbr.rel (0) target = $region13
    $region12: #{tpu_custom_call.1} parent=1 // pred_region
      _
    $region13: #{tpu_custom_call.1} parent=1 // pred_fallthru
      _
    // Predicated region
    $region14: #{tpu_custom_call.1} parent=1 // pred_check
      _
    $region15: #{tpu_custom_call.1} parent=1 // pred_check_branch
      %36 = sbr.rel (0) target = $region17
    $region16: #{tpu_custom_call.1} parent=1 // pred_region
      %37 = dma.done [#allocation3], 128
    $region17: #{tpu_custom_call.1} parent=1 // pred_fallthru
      _
    // Predicated region
    $region18: #{tpu_custom_call.1} parent=1 // pred_check
      _
    $region19: #{tpu_custom_call.1} parent=1 // pred_check_branch
      %39 = sbr.rel (0) target = $region21
    $region20: #{tpu_custom_call.1} parent=1 // pred_region
      %40 = dma.done [#allocation6], 1024
    $region21: #{tpu_custom_call.1} parent=1 // pred_fallthru
      _
    %v41 = vld [vmem:[#allocation2] sm:$0xff]
    %v42 = vld [vmem:[#allocation5] sm:$0xff]
    %v43 = vld [vmem:[#allocation5 + $0x8] sm:$0xff]
    %v44 = vld [vmem:[#allocation5 + $0x10] sm:$0xff]
    %v45 = vld [vmem:[#allocation5 + $0x18] sm:$0xff]
    %v46 = vld [vmem:[#allocation5 + $0x20] sm:$0xff]
    %v47 = vld [vmem:[#allocation5 + $0x28] sm:$0xff]
    %v48 = vld [vmem:[#allocation5 + $0x30] sm:$0xff]
    %v49 = vld [vmem:[#allocation5 + $0x38] sm:$0xff]
    %v50 = vld [vmem:[%s2] sm:$0x3]
    %v52 = vlaneseq
    %v53 = vshrl.u32 %v52, 7
    %v54 = vsub.s32 0, %v53
    %v55 = vrot.slane %v50, %v54
    %v56 = vlaneseq
    %v57 = vshrl.u32 %v56, 7
    %v58 = vsub.s32 1, %v57
    %v59 = vrot.slane %v50, %v58
    %vm62 = vcmask 261120
    %v64 = vsel %vm62, %v41, 0
    %66 = vmatprep.subr.mxu0 %v43
    %67 = vmatpush1.msra.mxu0 %v42
    %68 = vmatprep.subr.mxu0 %v45
    %69 = vmatpush1.msra.mxu0 %v44
    %70 = vmatprep.subr.mxu0 %v47
    %71 = vmatpush1.msra.mxu0 %v46
    %72 = vmatprep.subr.mxu0 %v49
    %73 = vmatpush1.msra.mxu0 %v48
    %74 = vmatprep.subr.mxu0 0.0
    %75 = vmatpush1.msra.mxu0 0.0
    %76 = vmatprep.subr.mxu0 0.0
    %77 = vmatpush1.msra.mxu0 0.0
    %78 = vmatprep.subr.mxu0 0.0
    %79 = vmatpush1.msra.mxu0 0.0
    %80 = vmatprep.subr.mxu0 0.0
    %81 = vmatpush1.msra.mxu0 0.0
    %82 = vmatprep.subr.mxu0 0.0
    %83 = vmatpush1.msra.mxu0 0.0
    %84 = vmatprep.subr.mxu0 0.0
    %85 = vmatpush1.msra.mxu0 0.0
    %86 = vmatprep.subr.mxu0 0.0
    %87 = vmatpush1.msra.mxu0 0.0
    %88 = vmatprep.subr.mxu0 0.0
    %89 = vmatpush1.msra.mxu0 0.0
    %90 = vmatprep.subr.mxu0 0.0
    %91 = vmatpush1.msra.mxu0 0.0
    %92 = vmatprep.subr.mxu0 0.0
    %93 = vmatpush1.msra.mxu0 0.0
    %94 = vmatprep.subr.mxu0 0.0
    %95 = vmatpush1.msra.mxu0 0.0
    %96 = vmatprep.subr.mxu0 0.0
    %97 = vmatpush1.msra.mxu0 0.0
    %98 = vmatprep.subr.mxu0 0.0
    %99 = vmatpush1.msra.mxu0 0.0
    %100 = vmatprep.subr.mxu0 0.0
    %101 = vmatpush1.msra.mxu0 0.0
    %102 = vmatprep.subr.mxu0 0.0
    %103 = vmatpush1.msra.mxu0 0.0
    %104 = vmatprep.subr.mxu0 0.0
    %105 = vmatpush1.msra.mxu0 0.0
    %106 = vmatprep.subr.mxu0 0.0
    %107 = vmatpush1.msra.mxu0 0.0
    %108 = vmatprep.subr.mxu0 0.0
    %109 = vmatpush1.msra.mxu0 0.0
    %110 = vmatprep.subr.mxu0 0.0
    %111 = vmatpush1.msra.mxu0 0.0
    %112 = vmatprep.subr.mxu0 0.0
    %113 = vmatpush1.msra.mxu0 0.0
    %114 = vmatprep.subr.mxu0 0.0
    %115 = vmatpush1.msra.mxu0 0.0
    %116 = vmatprep.subr.mxu0 0.0
    %117 = vmatpush1.msra.mxu0 0.0
    %118 = vmatprep.subr.mxu0 0.0
    %119 = vmatpush1.msra.mxu0 0.0
    %120 = vmatprep.subr.mxu0 0.0
    %121 = vmatpush1.msra.mxu0 0.0
    %122 = vmatprep.subr.mxu0 0.0
    %123 = vmatpush1.msra.mxu0 0.0
    %124 = vmatprep.subr.mxu0 0.0
    %125 = vmatpush1.msra.mxu0 0.0
    %126 = vmatprep.subr.mxu0 0.0
    %127 = vmatpush1.msra.mxu0 0.0
    %128 = vmatprep.subr.mxu0 0.0
    %129 = vmatpush1.msra.mxu0 0.0
    %130 = vmatprep.mubr.f32.mxu0 0.0
    %131 = vmatmul.mubr.f32.gmra.mrb[0].mxu0 %v64
    %v132 = vpop.f32.mrb[0].mxu0
    %v133 = vadd.f32 %v55, %v132
    %v134 = vpop.f32.mrb[0].mxu0
    %v135 = vadd.f32 %v59, %v134
    %136 = vdwg.mxu0
    %v137 = vmax.f32 %v133, 0.0
    %v138 = vmax.f32 %v135, 0.0
    %v139 = vpack.c.bf16 %v137, %v137
    %v140 = vpack.c.bf16 %v138, %v138
    %v143 = vunpack.c.l.b16 %v139
    %v144 = vunpack.c.l.b16 %v140
    %v145 = vpack.c.b16 %v144, %v143
    %147 = vst [vmem:[#allocation7] sm:$0xff] %v145
    // Predicated region
    $region22: #{tpu_custom_call.1} parent=1 // pred_check
      _
    $region23: #{tpu_custom_call.1} parent=1 // pred_check_branch
      %149 = sbr.rel (0) target = $region25
    $region24: #{tpu_custom_call.1} parent=1 // pred_region
      %s151 = ssub.s32 128, 128
      %152 = vsyncadd [#allocation4], %s151
      %s154 = sshll.u32 [#allocation7], 4
      %s155 = int_to_ptr.vmem [resolvable:$true] %s154
      %157 = dma.vmem_to_hbm [thread:$0]  %s155, 128, %s3, [#allocation4]
    $region25: #{tpu_custom_call.1} parent=1 // pred_fallthru
      _
    // Predicated region
    $region26: #{tpu_custom_call.1} parent=1 // pred_check
      _
    $region27: #{tpu_custom_call.1} parent=1 // pred_check_branch
      %159 = sbr.rel (0) target = $region29
    $region28: #{tpu_custom_call.1} parent=1 // pred_region
      %160 = dma.done [#allocation4], 128
    $region29: #{tpu_custom_call.1} parent=1 // pred_fallthru
      _
    %161 = vsyncpa [#allocation3], 1
    %162 = vsyncpa [#allocation6], 1
    %163 = vsyncpa [#allocation4], 1

</llo_original>
